<compile_context>
chip_gen: v7x
topology: tpu7x:2x2x1
jax: 0.10.0
libtpu: 0.0.40
codegen_flags: <defaults>
</compile_context>

<pallas_src>
import functools

import jax
import jax.numpy as jnp
import numpy as np
from jax import lax
from jax.experimental import pallas as pl
from jax.experimental.pallas import tpu as pltpu


def _dice_partial_kernel(x_ref, t_ref, inter_out, ysum_out, zsum_out,
                         inter_acc, ysum_acc, zsum_acc,
                         *, n_classes, apply_softmax, lane_acc, n_chunks,
                         n_tail_chunks, rem, ragged, static_unroll_max):
    j = pl.program_id(1)
    last_j = pl.num_programs(1) - 1

    @pl.when(j == 0)
    def _():
        inter_acc[...] = jnp.zeros_like(inter_acc)
        ysum_acc[...] = jnp.zeros_like(ysum_acc)
        zsum_acc[...] = jnp.zeros_like(zsum_acc)

    # Chunk-invariant class iota, hoisted out of the per-chunk hot loop.
    cls = jax.lax.broadcasted_iota(jnp.int32, (n_classes, lane_acc), 0)
    zeros = jnp.zeros((n_classes, lane_acc), jnp.float32)

    def chunk_stats(start, valid):
        """Partial sums for one lane_acc-wide chunk (register-resident)."""
        x = x_ref[:, pl.ds(start, lane_acc)].astype(jnp.float32)   # (C, lane)
        t = t_ref[:, pl.ds(start, lane_acc)].astype(jnp.int32)     # (1, lane)
        if valid is not None:
            x = jnp.where(valid, x, 0.0)            # keep garbage/NaN out
        if apply_softmax:
            # Softmax over the class (sublane) axis, per pixel (lane).
            m = jnp.max(x, axis=0, keepdims=True)
            e = jnp.exp(x - m)
            denom = jnp.sum(e, axis=0, keepdims=True)
            x = e * pl.reciprocal(denom, approx=True)   # EUP slot, ~free
            if valid is not None:
                x = jnp.where(valid, x, 0.0)
        hit = t == cls
        if valid is not None:
            hit = jnp.logical_and(hit, valid)       # garbage labels must not hit
        onehot = hit.astype(jnp.float32)
        return x * onehot, onehot, x * x            # onehot^2 == onehot

    def accumulate(n_iters, masked):
        if n_iters == 0:
            return
        lane = (jax.lax.broadcasted_iota(jnp.int32, (1, lane_acc), 1)
                if masked else None)

        def body(k, carry):
            i_s, y_s, z_s = carry
            start = k * lane_acc
            if isinstance(k, int):
                ds_start = start
            elif lane_acc % 128 == 0:
                ds_start = pl.multiple_of(start, 128)
            else:
                ds_start = start
            valid = (lane + start) < rem if masked else None
            di, dy, dz = chunk_stats(ds_start, valid)
            return i_s + di, y_s + dy, z_s + dz

        if n_iters <= static_unroll_max:
            carry = (zeros, zeros, zeros)
            for k in range(n_iters):
                carry = body(k, carry)
            i_s, y_s, z_s = carry
        else:
            i_s, y_s, z_s = lax.fori_loop(0, n_iters, body,
                                          (zeros, zeros, zeros))
        inter_acc[...] += i_s
        ysum_acc[...] += y_s
        zsum_acc[...] += z_s

    if ragged:
        # Mask cost only on the last pixel tile; full tiles run unmasked.
        @pl.when(j != last_j)
        def _():
            accumulate(n_chunks, masked=False)

        @pl.when(j == last_j)
        def _():
            accumulate(n_tail_chunks, masked=True)
    else:
        accumulate(n_chunks, masked=False)

    @pl.when(j == last_j)
    def _():
        # Single cross-lane (XLU) reduce per batch, at finalize only.
        inter_out[...] = jnp.sum(inter_acc[...], axis=-1, keepdims=True)
        ysum_out[...] = jnp.sum(ysum_acc[...], axis=-1, keepdims=True)
        zsum_out[...] = jnp.sum(zsum_acc[...], axis=-1, keepdims=True)


def dice_loss(inputs, target, weight=None, softmax=False,
              max_tile_pix=131072, static_unroll_max=16):
    """Pallas DiceLoss forward.

    inputs: (B, C, H, W) float logits/probabilities (NCHW, as in PyTorch);
            f32 or bf16 (upcast to f32 in-kernel).
    target: (B, H, W) integer class labels; int8/uint8 accepted (C < 128)
            to shrink the HBM label stream.
    """
    B, C, H, W = inputs.shape
    HW = H * W

    # Free reshapes only — no transpose, no pad, no extra HBM traffic.
    x = inputs.reshape(B, C, HW)
    t = target.reshape(B, 1, HW)
    if not jnp.issubdtype(t.dtype, jnp.integer):
        t = t.astype(jnp.int32)

    # Pixel tile: full extent if it fits, else a large 128-multiple tile.
    tile_pix = HW if HW <= max_tile_pix else max_tile_pix
    n_pix_tiles = pl.cdiv(HW, tile_pix)
    rem = HW % tile_pix
    ragged = rem != 0

    # Lane-chunk width: bound register pressure (carries + chunk temps) by the
    # padded class count while staying a multiple of 128 when possible.
    c_pad = ((C + 7) // 8) * 8
    lane_target = max(128, min(512, (4096 // c_pad) // 128 * 128))
    if tile_pix % 128 == 0:
        lane_acc = lane_target
        while tile_pix % lane_acc != 0:
            lane_acc //= 2          # 512 -> 256 -> 128 (128 always divides)
    else:
        lane_acc = tile_pix         # single-chunk small-image case
    n_chunks = tile_pix // lane_acc
    n_tail_chunks = -(-rem // lane_acc) if ragged else 0

    kernel = functools.partial(
        _dice_partial_kernel,
        n_classes=C, apply_softmax=softmax, lane_acc=lane_acc,
        n_chunks=n_chunks, n_tail_chunks=n_tail_chunks, rem=rem,
        ragged=ragged, static_unroll_max=static_unroll_max)

    part_shape = jax.ShapeDtypeStruct((B, C, 1), jnp.float32)
    out_spec = pl.BlockSpec((None, C, 1), lambda b, j: (b, 0, 0))

    p_inter, p_ysum, p_zsum = pl.pallas_call(
        kernel,
        out_shape=(part_shape, part_shape, part_shape),
        grid_spec=pltpu.PrefetchScalarGridSpec(
            num_scalar_prefetch=0,
            grid=(B, n_pix_tiles),
            in_specs=[
                pl.BlockSpec((None, C, tile_pix), lambda b, j: (b, 0, j)),  # scores
                pl.BlockSpec((None, 1, tile_pix), lambda b, j: (b, 0, j)),  # labels
            ],
            out_specs=[out_spec, out_spec, out_spec],
            scratch_shapes=[pltpu.VMEM((C, lane_acc), jnp.float32)] * 3,
        ),
        compiler_params=pltpu.CompilerParams(
            dimension_semantics=("parallel", "arbitrary"),
            vmem_limit_bytes=32 * 1024 * 1024,
        ),
    )(x, t)

    # Tiny O(B*C) finalize in plain JAX (keeps the kernel a pure partial-sum
    # streamer and lets the batch axis split across TensorCores on v7x).
    # TODO(synk): the softmax=False branch of the reference applies
    # torch.squeeze; that is a no-op unless some dim is 1 (not modeled here).
    smooth = 1e-05
    inter = jnp.sum(p_inter[..., 0], axis=0)   # (C,)
    ysum = jnp.sum(p_ysum[..., 0], axis=0)
    zsum = jnp.sum(p_zsum[..., 0], axis=0)
    dice = 1.0 - (2.0 * inter + smooth) / (zsum + ysum + smooth)
    if weight is None:
        weight = [1.0] * C
    w = jnp.asarray(weight, dtype=jnp.float32)
    return jnp.sum(dice * w) / C


def dice_loss_ref(inputs, target, weight=None, softmax=False):
    """Plain-JAX reference mirroring the PyTorch module."""
    B, C, H, W = inputs.shape
    x = inputs.astype(jnp.float32)
    if softmax:
        x = jax.nn.softmax(x, axis=1)
    onehot = jax.nn.one_hot(target, C, axis=1, dtype=jnp.float32)
    if weight is None:
        weight = [1.0] * C
    smooth = 1e-05
    loss = 0.0
    for i in range(C):
        s = x[:, i]
        tt = onehot[:, i]
        inter = jnp.sum(s * tt)
        ys = jnp.sum(tt * tt)
        zs = jnp.sum(s * s)
        dice = 1.0 - (2.0 * inter + smooth) / (zs + ys + smooth)
        loss = loss + dice * weight[i]
    return loss / C


if __name__ == "__main__":
    key = jax.random.PRNGKey(0)
    k1, k2, k3, k4 = jax.random.split(key, 4)
    B, C, H, W = 2, 4, 16, 16

    logits = jax.random.normal(k1, (B, C, H, W), dtype=jnp.float32)
    labels = jax.random.randint(k2, (B, H, W), 0, C).astype(jnp.int32)

    # 1) softmax path (EUP approximate reciprocal -> looser tolerance), int32 labels.
    out_sm = jax.block_until_ready(dice_loss(logits, labels, softmax=True))
    ref_sm = jax.block_until_ready(dice_loss_ref(logits, labels, softmax=True))
    assert np.allclose(np.asarray(out_sm), np.asarray(ref_sm),
                       atol=5e-3, rtol=5e-3), (out_sm, ref_sm)

    # 2) probability-input path with per-class weights, int8 labels: exact math.
    probs = jax.nn.softmax(logits, axis=1)
    wts = [0.1, 0.2, 0.3, 0.4]
    labels8 = labels.astype(jnp.int8)
    out_ns = jax.block_until_ready(
        dice_loss(probs, labels8, weight=wts, softmax=False))
    ref_ns = jax.block_until_ready(
        dice_loss_ref(probs, labels, weight=wts, softmax=False))
    assert np.allclose(np.asarray(out_ns), np.asarray(ref_ns),
                       atol=1e-5, rtol=1e-5), (out_ns, ref_ns)

    # 3) multi-tile + ragged tail + dynamic (fori_loop) chunking path.
    H3 = W3 = 48   # HW=2304 with max_tile_pix=1024 -> 3 tiles, rem=256
    logits3 = jax.random.normal(k3, (B, C, H3, W3), dtype=jnp.float32)
    labels3 = jax.random.randint(k4, (B, H3, W3), 0, C).astype(jnp.int8)
    out_rg = jax.block_until_ready(
        dice_loss(logits3, labels3, softmax=True,
                  max_tile_pix=1024, static_unroll_max=0))
    ref_rg = jax.block_until_ready(dice_loss_ref(logits3, labels3, softmax=True))
    assert np.allclose(np.asarray(out_rg), np.asarray(ref_rg),
                       atol=5e-3, rtol=5e-3), (out_rg, ref_rg)

    print("KERNEL_OK")
</pallas_src>

<mosaic_0001>
module attributes {stable_mosaic.version = 11 : i64} {
  func.func @_dice_partial_kernel(%arg0: i32, %arg1: i32, %arg2: memref<1x4x256xf32, #tpu.memory_space<vmem>>, %arg3: memref<1x1x256xi32, #tpu.memory_space<vmem>>, %arg4: memref<1x4x1xf32, #tpu.memory_space<vmem>>, %arg5: memref<1x4x1xf32, #tpu.memory_space<vmem>>, %arg6: memref<1x4x1xf32, #tpu.memory_space<vmem>>, %arg7: memref<4x256xf32, #tpu.memory_space<vmem>>, %arg8: memref<4x256xf32, #tpu.memory_space<vmem>>, %arg9: memref<4x256xf32, #tpu.memory_space<vmem>>) attributes {dimension_semantics = [#tpu.dimension_semantics<parallel>, #tpu.dimension_semantics<arbitrary>], iteration_bounds = array<i64: 2, 1>, scalar_prefetch = 0 : i64, scratch_operands = 3 : i64, tpu.core_type = #tpu.core_type<tc>, window_params = [{transform_indices = @transform_0, window_bounds = array<i64: 1, 4, 256>}, {transform_indices = @transform_1, window_bounds = array<i64: 1, 1, 256>}, {transform_indices = @transform_2, window_bounds = array<i64: 1, 4, 1>}, {transform_indices = @transform_3, window_bounds = array<i64: 1, 4, 1>}, {transform_indices = @transform_4, window_bounds = array<i64: 1, 4, 1>}]} {
    %c0_i32 = arith.constant 0 : i32
    %0 = arith.cmpi eq, %arg1, %c0_i32 : i32
    %1 = arith.extui %0 : i1 to i32
    %c0_i32_0 = arith.constant 0 : i32
    %2 = arith.cmpi ne, %1, %c0_i32_0 : i32
    scf.if %2 {
      %cst_22 = arith.constant 0.000000e+00 : f32
      %40 = vector.broadcast %cst_22 : f32 to vector<4x256xf32>
      %c0_23 = arith.constant 0 : index
      %c0_24 = arith.constant 0 : index
      %41 = vector.load %arg7[%c0_23, %c0_24] : memref<4x256xf32, #tpu.memory_space<vmem>>, vector<4x256xf32>
      tpu.vector_store %arg7[%c0_23, %c0_24], %40 {strides = array<i32>} : memref<4x256xf32, #tpu.memory_space<vmem>>, vector<4x256xf32>,
      %cst_25 = arith.constant 0.000000e+00 : f32
      %42 = vector.broadcast %cst_25 : f32 to vector<4x256xf32>
      %c0_26 = arith.constant 0 : index
      %c0_27 = arith.constant 0 : index
      %43 = vector.load %arg8[%c0_26, %c0_27] : memref<4x256xf32, #tpu.memory_space<vmem>>, vector<4x256xf32>
      tpu.vector_store %arg8[%c0_26, %c0_27], %42 {strides = array<i32>} : memref<4x256xf32, #tpu.memory_space<vmem>>, vector<4x256xf32>,
      %cst_28 = arith.constant 0.000000e+00 : f32
      %44 = vector.broadcast %cst_28 : f32 to vector<4x256xf32>
      %c0_29 = arith.constant 0 : index
      %c0_30 = arith.constant 0 : index
      %45 = vector.load %arg9[%c0_29, %c0_30] : memref<4x256xf32, #tpu.memory_space<vmem>>, vector<4x256xf32>
      tpu.vector_store %arg9[%c0_29, %c0_30], %44 {strides = array<i32>} : memref<4x256xf32, #tpu.memory_space<vmem>>, vector<4x256xf32>,
    } else {
    }
    %3 = tpu.iota {dimensions = array<i32: 0>} : vector<4x256xi32>
    %cst = arith.constant 0.000000e+00 : f32
    %4 = vector.broadcast %cst : f32 to vector<4x256xf32>
    %c0 = arith.constant 0 : index
    %c0_1 = arith.constant 0 : index
    %c0_2 = arith.constant 0 : index
    %5 = vector.load %arg2[%c0, %c0_1, %c0_2] : memref<1x4x256xf32, #tpu.memory_space<vmem>>, vector<1x4x256xf32>
    %6 = vector.shape_cast %5 : vector<1x4x256xf32> to vector<4x256xf32>
    %c0_3 = arith.constant 0 : index
    %c0_4 = arith.constant 0 : index
    %c0_5 = arith.constant 0 : index
    %7 = vector.load %arg3[%c0_3, %c0_4, %c0_5] : memref<1x1x256xi32, #tpu.memory_space<vmem>>, vector<1x1x256xi32>
    %8 = vector.shape_cast %7 : vector<1x1x256xi32> to vector<1x256xi32>
    %cst_6 = arith.constant dense<0xFF800000> : vector<256xf32>
    %9 = vector.multi_reduction <maximumf>, %6, %cst_6 [0] : vector<4x256xf32> to vector<256xf32>
    %10 = vector.shape_cast %9 : vector<256xf32> to vector<1x256xf32>
    %11 = vector.broadcast %10 : vector<1x256xf32> to vector<4x256xf32>
    %12 = arith.subf %6, %11 : vector<4x256xf32>
    %13 = math.exp %12 : vector<4x256xf32>
    %cst_7 = arith.constant dense<0.000000e+00> : vector<256xf32>
    %14 = vector.multi_reduction <add>, %13, %cst_7 [0] : vector<4x256xf32> to vector<256xf32>
    %15 = vector.shape_cast %14 : vector<256xf32> to vector<1x256xf32>
    %16 = tpu.reciprocal %15 {approx = true} : vector<1x256xf32> -> vector<1x256xf32>
    %17 = vector.broadcast %16 : vector<1x256xf32> to vector<4x256xf32>
    %18 = arith.mulf %13, %17 : vector<4x256xf32>
    %19 = vector.broadcast %8 : vector<1x256xi32> to vector<4x256xi32>
    %20 = arith.cmpi eq, %19, %3 : vector<4x256xi32>
    %21 = arith.extui %20 : vector<4x256xi1> to vector<4x256xi32>
    %22 = arith.sitofp %21 : vector<4x256xi32> to vector<4x256xf32>
    %23 = arith.mulf %18, %22 : vector<4x256xf32>
    %24 = arith.mulf %18, %18 : vector<4x256xf32>
    %25 = arith.addf %4, %23 : vector<4x256xf32>
    %26 = arith.addf %4, %22 : vector<4x256xf32>
    %27 = arith.addf %4, %24 : vector<4x256xf32>
    %c0_8 = arith.constant 0 : index
    %c0_9 = arith.constant 0 : index
    %28 = vector.load %arg7[%c0_8, %c0_9] : memref<4x256xf32, #tpu.memory_space<vmem>>, vector<4x256xf32>
    %29 = arith.addf %28, %25 : vector<4x256xf32>
    %c0_10 = arith.constant 0 : index
    %c0_11 = arith.constant 0 : index
    %30 = vector.load %arg7[%c0_10, %c0_11] : memref<4x256xf32, #tpu.memory_space<vmem>>, vector<4x256xf32>
    tpu.vector_store %arg7[%c0_10, %c0_11], %29 {strides = array<i32>} : memref<4x256xf32, #tpu.memory_space<vmem>>, vector<4x256xf32>,
    %c0_12 = arith.constant 0 : index
    %c0_13 = arith.constant 0 : index
    %31 = vector.load %arg8[%c0_12, %c0_13] : memref<4x256xf32, #tpu.memory_space<vmem>>, vector<4x256xf32>
    %32 = arith.addf %31, %26 : vector<4x256xf32>
    %c0_14 = arith.constant 0 : index
    %c0_15 = arith.constant 0 : index
    %33 = vector.load %arg8[%c0_14, %c0_15] : memref<4x256xf32, #tpu.memory_space<vmem>>, vector<4x256xf32>
    tpu.vector_store %arg8[%c0_14, %c0_15], %32 {strides = array<i32>} : memref<4x256xf32, #tpu.memory_space<vmem>>, vector<4x256xf32>,
    %c0_16 = arith.constant 0 : index
    %c0_17 = arith.constant 0 : index
    %34 = vector.load %arg9[%c0_16, %c0_17] : memref<4x256xf32, #tpu.memory_space<vmem>>, vector<4x256xf32>
    %35 = arith.addf %34, %27 : vector<4x256xf32>
    %c0_18 = arith.constant 0 : index
    %c0_19 = arith.constant 0 : index
    %36 = vector.load %arg9[%c0_18, %c0_19] : memref<4x256xf32, #tpu.memory_space<vmem>>, vector<4x256xf32>
    tpu.vector_store %arg9[%c0_18, %c0_19], %35 {strides = array<i32>} : memref<4x256xf32, #tpu.memory_space<vmem>>, vector<4x256xf32>,
    %c0_i32_20 = arith.constant 0 : i32
    %37 = arith.cmpi eq, %arg1, %c0_i32_20 : i32
    %38 = arith.extui %37 : i1 to i32
    %c0_i32_21 = arith.constant 0 : i32
    %39 = arith.cmpi ne, %38, %c0_i32_21 : i32
    scf.if %39 {
      %c0_22 = arith.constant 0 : index
      %c0_23 = arith.constant 0 : index
      %40 = vector.load %arg7[%c0_22, %c0_23] : memref<4x256xf32, #tpu.memory_space<vmem>>, vector<4x256xf32>
      %cst_24 = arith.constant dense<0.000000e+00> : vector<4xf32>
      %41 = vector.multi_reduction <add>, %40, %cst_24 [1] : vector<4x256xf32> to vector<4xf32>
      %42 = vector.shape_cast %41 : vector<4xf32> to vector<4x1xf32>
      %c0_25 = arith.constant 0 : index
      %c0_26 = arith.constant 0 : index
      %c0_27 = arith.constant 0 : index
      %43 = vector.load %arg4[%c0_25, %c0_26, %c0_27] : memref<1x4x1xf32, #tpu.memory_space<vmem>>, vector<1x4x1xf32>
      %44 = vector.shape_cast %43 : vector<1x4x1xf32> to vector<4x1xf32>
      %45 = vector.shape_cast %42 : vector<4x1xf32> to vector<1x4x1xf32>
      tpu.vector_store %arg4[%c0_25, %c0_26, %c0_27], %45 {strides = array<i32>} : memref<1x4x1xf32, #tpu.memory_space<vmem>>, vector<1x4x1xf32>,
      %c0_28 = arith.constant 0 : index
      %c0_29 = arith.constant 0 : index
      %46 = vector.load %arg8[%c0_28, %c0_29] : memref<4x256xf32, #tpu.memory_space<vmem>>, vector<4x256xf32>
      %cst_30 = arith.constant dense<0.000000e+00> : vector<4xf32>
      %47 = vector.multi_reduction <add>, %46, %cst_30 [1] : vector<4x256xf32> to vector<4xf32>
      %48 = vector.shape_cast %47 : vector<4xf32> to vector<4x1xf32>
      %c0_31 = arith.constant 0 : index
      %c0_32 = arith.constant 0 : index
      %c0_33 = arith.constant 0 : index
      %49 = vector.load %arg5[%c0_31, %c0_32, %c0_33] : memref<1x4x1xf32, #tpu.memory_space<vmem>>, vector<1x4x1xf32>
      %50 = vector.shape_cast %49 : vector<1x4x1xf32> to vector<4x1xf32>
      %51 = vector.shape_cast %48 : vector<4x1xf32> to vector<1x4x1xf32>
      tpu.vector_store %arg5[%c0_31, %c0_32, %c0_33], %51 {strides = array<i32>} : memref<1x4x1xf32, #tpu.memory_space<vmem>>, vector<1x4x1xf32>,
      %c0_34 = arith.constant 0 : index
      %c0_35 = arith.constant 0 : index
      %52 = vector.load %arg9[%c0_34, %c0_35] : memref<4x256xf32, #tpu.memory_space<vmem>>, vector<4x256xf32>
      %cst_36 = arith.constant dense<0.000000e+00> : vector<4xf32>
      %53 = vector.multi_reduction <add>, %52, %cst_36 [1] : vector<4x256xf32> to vector<4xf32>
      %54 = vector.shape_cast %53 : vector<4xf32> to vector<4x1xf32>
      %c0_37 = arith.constant 0 : index
      %c0_38 = arith.constant 0 : index
      %c0_39 = arith.constant 0 : index
      %55 = vector.load %arg6[%c0_37, %c0_38, %c0_39] : memref<1x4x1xf32, #tpu.memory_space<vmem>>, vector<1x4x1xf32>
      %56 = vector.shape_cast %55 : vector<1x4x1xf32> to vector<4x1xf32>
      %57 = vector.shape_cast %54 : vector<4x1xf32> to vector<1x4x1xf32>
      tpu.vector_store %arg6[%c0_37, %c0_38, %c0_39], %57 {strides = array<i32>} : memref<1x4x1xf32, #tpu.memory_space<vmem>>, vector<1x4x1xf32>,
    } else {
    }
    return
  }
  func.func @transform_0(%arg0: i32, %arg1: i32) -> (i32, i32, i32) {
    %c0_i32 = arith.constant 0 : i32
    %c0_i32_0 = arith.constant 0 : i32
    return %arg0, %c0_i32, %arg1 : i32, i32, i32
  }
  func.func @transform_1(%arg0: i32, %arg1: i32) -> (i32, i32, i32) {
    %c0_i32 = arith.constant 0 : i32
    %c0_i32_0 = arith.constant 0 : i32
    return %arg0, %c0_i32, %arg1 : i32, i32, i32
  }
  func.func @transform_2(%arg0: i32, %arg1: i32) -> (i32, i32, i32) {
    %c0_i32 = arith.constant 0 : i32
    %c0_i32_0 = arith.constant 0 : i32
    %c0_i32_1 = arith.constant 0 : i32
    return %arg0, %c0_i32, %c0_i32_0 : i32, i32, i32
  }
  func.func @transform_3(%arg0: i32, %arg1: i32) -> (i32, i32, i32) {
    %c0_i32 = arith.constant 0 : i32
    %c0_i32_0 = arith.constant 0 : i32
    %c0_i32_1 = arith.constant 0 : i32
    return %arg0, %c0_i32, %c0_i32_0 : i32, i32, i32
  }
  func.func @transform_4(%arg0: i32, %arg1: i32) -> (i32, i32, i32) {
    %c0_i32 = arith.constant 0 : i32
    %c0_i32_0 = arith.constant 0 : i32
    %c0_i32_1 = arith.constant 0 : i32
    return %arg0, %c0_i32, %c0_i32_0 : i32, i32, i32
  }
}

</mosaic_0001>

<llo_original>
// kernel: tpu_custom_call.1
$region0: #{tpu_custom_call.1}
  #allocation0 [shape = 'u32[]', space=smem, size = 0x4, offset = 0x4, fixed_abs, tag = 'smem constant byte address 0x4 - core index']
  #allocation1 [shape = 'u32[144,128]{1,0:T(1,128)}', space=vmem, size = 0x12000, scoped, tag = 'internal scratch']
  #allocation2 [shape = 'f32[4,256]{1,0:T(4,128)}', space=vmem, size = 0x1000, scoped, tag = 'scratch operand']
  #allocation3 [shape = 'f32[4,256]{1,0:T(4,128)}', space=vmem, size = 0x1000, scoped, tag = 'scratch operand']
  #allocation4 [shape = 'f32[4,256]{1,0:T(4,128)}', space=vmem, size = 0x1000, scoped, tag = 'scratch operand']
  %s0 = inlined_call_operand.hbm [shape: f32[2,4,256], index: 0, kind: input, shape index: {}]
  %s1 = inlined_call_operand.hbm [shape: s32[2,1,256], index: 1, kind: input, shape index: {}]
  %s2 = inlined_call_operand.vmem [shape: f32[2,4,1], index: 2, kind: output, shape index: {0}]
  %s3 = inlined_call_operand.vmem [shape: f32[2,4,1], index: 3, kind: output, shape index: {1}]
  %s4 = inlined_call_operand.vmem [shape: f32[2,4,1], index: 4, kind: output, shape index: {2}]
  %5 = xla_tuple %s2, %s3, %s4
  %s6 = sld [smem:[#allocation0]]
  $region73: #{tpu_custom_call.1} parent=0
    _
  %s8 = ssub.s32 1, %s6
  %s9 = scalar_select 0, %s8, %s6
  $region1: #{tpu_custom_call.1} parent=0
    #allocation5 [shape = 'u8[8192]{0}', space=vmem, size = 0x2000, scoped, tag = 'input window, operand 0']
    #allocation6 [shape = 's32[2]{0}', space=sflag, size = 0x8, scoped, tag = 'scoped memory for tpu_custom_call.1']
    #allocation7 [shape = 'u8[2048]{0}', space=vmem, size = 0x800, scoped, tag = 'input window, operand 1']
    #allocation8 [shape = 's32[2]{0}', space=sflag, size = 0x8, scoped, tag = 'scoped memory for tpu_custom_call.1']
    %10 = vsyncpa [#allocation6], 0
    %s11 = scalar_lea.sflag [#allocation6], 1
    %12 = vsyncpa %s11, 0
    %13 = vsyncpa [#allocation8], 0
    %s14 = scalar_lea.sflag [#allocation8], 1
    %15 = vsyncpa %s14, 0
    loop: start=0, step=1, limit=4
    $region2: #{tpu_custom_call.1} parent=1 // loop_pre_header
      _
    $region3: #{tpu_custom_call.1} parent=1 // loop_header
      %s17 = sphi 0, %s21
      %p18 = scmp.ge.s32.totalorder %s17, 4
      %s24 = sphi 0, %s36
      %s25 = sphi 0, %s32
      %s26 = sphi 0, %s24
      %s27 = sphi 0, %s25
      %s28 = sphi 0, %s26
      %s29 = sphi 0, %s27
      %s41 = sphi 0, %s43
      %s44 = sphi 0, %s41
      %s45 = sphi 0, %s44
      %s61 = sphi 0, %s45
      %s69 = sphi 0, %s71
      %s72 = sphi 0, %s69
      %s73 = sphi 0, %s72
      %s89 = sphi 0, %s73
      %s95 = sphi 0, %s97
      %s98 = sphi 0, %s95
      %s99 = sphi 0, %s98
      %s115 = sphi 0, %s99
      %s121 = sphi 0, %s123
      %s124 = sphi 0, %s121
      %s125 = sphi 0, %s124
      %s141 = sphi 0, %s125
      %s147 = sphi 0, %s149
      %s150 = sphi 0, %s147
      %s151 = sphi 0, %s150
      %s167 = sphi 0, %s151
    $region4: #{tpu_custom_call.1} parent=1 // loop_header_branch
      %20 = sbr.rel (%p18) target = $region8
    $region5: #{tpu_custom_call.1} parent=1 // loop_body
      %s22 = ssub.s32 %s17, 1
      %s23 = ssub.s32 %s17, 2
      %s30 = sadd.s32 1, %s25
      %p31 = scmp.ge.s32.totalorder %s30, 1
      %s32 = scalar_select %p31, 0, %s30
      %s33 = sadd.s32 1, %s24
      %s34 = scalar_select %p31, %s33, %s24
      %p35 = scmp.ge.s32.totalorder %s34, 2
      %s36 = scalar_select %p35, 0, %s34
      %s37 = ssub.s32 %s24, %s36
      %s38 = ssub.s32 %s25, %s32
      %s39 = sor.u32 %s37, %s38
      %p40 = scmp.eq.s32.totalorder %s39, 0
      %s42 = sadd.s32 %s41, 1
      %s43 = scalar_select %p40, %s41, %s42
      %p46 = pneg %p40
      %p47 = scmp.eq.s32.totalorder %s17, 1
      %p48 = por %p46, %p47
      %p49 = scmp.ne.s32.totalorder %s41, %s44
      %p50 = scmp.eq.s32.totalorder %s17, 0
      %p51 = por %p49, %p50
      %p52 = scmp.ne.s32.totalorder %s41, %s44
      %p53 = scmp.eq.s32.totalorder %s22, 1
      %p54 = por %p52, %p53
      %p55 = scmp.ne.s32.totalorder %s44, %s45
      %p56 = scmp.eq.s32.totalorder %s22, 0
      %p57 = por %p55, %p56
      %p58 = scmp.ne.s32.totalorder %s44, %s45
      %p59 = scmp.eq.s32.totalorder %s23, 1
      %p60 = por %p58, %p59
      %p62 = scmp.ne.s32.totalorder %s45, %s61
      %p63 = scmp.eq.s32.totalorder %s23, 0
      %p64 = por %p62, %p63
      %s65 = ssub.s32 %s24, %s36
      %s66 = ssub.s32 %s25, %s32
      %s67 = sor.u32 %s65, %s66
      %p68 = scmp.eq.s32.totalorder %s67, 0
      %s70 = sadd.s32 %s69, 1
      %s71 = scalar_select %p68, %s69, %s70
      %p74 = pneg %p68
      %p75 = scmp.eq.s32.totalorder %s17, 1
      %p76 = por %p74, %p75
      %p77 = scmp.ne.s32.totalorder %s69, %s72
      %p78 = scmp.eq.s32.totalorder %s17, 0
      %p79 = por %p77, %p78
      %p80 = scmp.ne.s32.totalorder %s69, %s72
      %p81 = scmp.eq.s32.totalorder %s22, 1
      %p82 = por %p80, %p81
      %p83 = scmp.ne.s32.totalorder %s72, %s73
      %p84 = scmp.eq.s32.totalorder %s22, 0
      %p85 = por %p83, %p84
      %p86 = scmp.ne.s32.totalorder %s72, %s73
      %p87 = scmp.eq.s32.totalorder %s23, 1
      %p88 = por %p86, %p87
      %p90 = scmp.ne.s32.totalorder %s73, %s89
      %p91 = scmp.eq.s32.totalorder %s23, 0
      %p92 = por %p90, %p91
      %s93 = ssub.s32 %s24, %s36
      %p94 = scmp.eq.s32.totalorder %s93, 0
      %s96 = sadd.s32 %s95, 1
      %s97 = scalar_select %p94, %s95, %s96
      %p100 = pneg %p94
      %p101 = scmp.eq.s32.totalorder %s17, 1
      %p102 = por %p100, %p101
      %p103 = scmp.ne.s32.totalorder %s95, %s98
      %p104 = scmp.eq.s32.totalorder %s17, 0
      %p105 = por %p103, %p104
      %p106 = scmp.ne.s32.totalorder %s95, %s98
      %p107 = scmp.eq.s32.totalorder %s22, 1
      %p108 = por %p106, %p107
      %p109 = scmp.ne.s32.totalorder %s98, %s99
      %p110 = scmp.eq.s32.totalorder %s22, 0
      %p111 = por %p109, %p110
      %p112 = scmp.ne.s32.totalorder %s98, %s99
      %p113 = scmp.eq.s32.totalorder %s23, 1
      %p114 = por %p112, %p113
      %p116 = scmp.ne.s32.totalorder %s99, %s115
      %p117 = scmp.eq.s32.totalorder %s23, 0
      %p118 = por %p116, %p117
      %s119 = ssub.s32 %s24, %s36
      %p120 = scmp.eq.s32.totalorder %s119, 0
      %s122 = sadd.s32 %s121, 1
      %s123 = scalar_select %p120, %s121, %s122
      %p126 = pneg %p120
      %p127 = scmp.eq.s32.totalorder %s17, 1
      %p128 = por %p126, %p127
      %p129 = scmp.ne.s32.totalorder %s121, %s124
      %p130 = scmp.eq.s32.totalorder %s17, 0
      %p131 = por %p129, %p130
      %p132 = scmp.ne.s32.totalorder %s121, %s124
      %p133 = scmp.eq.s32.totalorder %s22, 1
      %p134 = por %p132, %p133
      %p135 = scmp.ne.s32.totalorder %s124, %s125
      %p136 = scmp.eq.s32.totalorder %s22, 0
      %p137 = por %p135, %p136
      %p138 = scmp.ne.s32.totalorder %s124, %s125
      %p139 = scmp.eq.s32.totalorder %s23, 1
      %p140 = por %p138, %p139
      %p142 = scmp.ne.s32.totalorder %s125, %s141
      %p143 = scmp.eq.s32.totalorder %s23, 0
      %p144 = por %p142, %p143
      %s145 = ssub.s32 %s24, %s36
      %p146 = scmp.eq.s32.totalorder %s145, 0
      %s148 = sadd.s32 %s147, 1
      %s149 = scalar_select %p146, %s147, %s148
      %p152 = pneg %p146
      %p153 = scmp.eq.s32.totalorder %s17, 1
      %p154 = por %p152, %p153
      %p155 = scmp.ne.s32.totalorder %s147, %s150
      %p156 = scmp.eq.s32.totalorder %s17, 0
      %p157 = por %p155, %p156
      %p158 = scmp.ne.s32.totalorder %s147, %s150
      %p159 = scmp.eq.s32.totalorder %s22, 1
      %p160 = por %p158, %p159
      %p161 = scmp.ne.s32.totalorder %s150, %s151
      %p162 = scmp.eq.s32.totalorder %s22, 0
      %p163 = por %p161, %p162
      %p164 = scmp.ne.s32.totalorder %s150, %s151
      %p165 = scmp.eq.s32.totalorder %s23, 1
      %p166 = por %p164, %p165
      %p168 = scmp.ne.s32.totalorder %s151, %s167
      %p169 = scmp.eq.s32.totalorder %s23, 0
      %p170 = por %p168, %p169
      %p171 = scmp.le.s32.totalorder 1, %s17
      %p172 = scmp.lt.s32.totalorder %s17, 3
      %p173 = pnand %p171, %p172
      %p174 = pneg %p173
      // Predicated region
      $region9: #{tpu_custom_call.1} parent=5 // pred_check
        _
      $region10: #{tpu_custom_call.1} parent=5 // pred_check_branch
        %176 = sbr.rel (%p173) target = $region12
      $region11: #{tpu_custom_call.1} parent=5 // pred_region
        %s177 = ssub.s32 %s17, 1
      $region12: #{tpu_custom_call.1} parent=5 // pred_fallthru
        _
      %p178 = scmp.lt.s32.totalorder %s17, 2
      // Predicated region
      $region13: #{tpu_custom_call.1} parent=5 // pred_check
        %p179 = pneg %p178
      $region14: #{tpu_custom_call.1} parent=5 // pred_check_branch
        %181 = sbr.rel (%p179) target = $region16
      $region15: #{tpu_custom_call.1} parent=5 // pred_region
        // Predicated region
        $region17: #{tpu_custom_call.1} parent=15 // pred_check
          %p182 = pneg %p51
        $region18: #{tpu_custom_call.1} parent=15 // pred_check_branch
          %184 = sbr.rel (%p182) target = $region20
        $region19: #{tpu_custom_call.1} parent=15 // pred_region
          %s185 = sand.u32 %s41, 1
          %s186 = scalar_lea.sflag [#allocation6], %s185
          %s187 = sand.u32 %s41, 1
          %s188 = smul.addr %s187, 8
          %s189 = scalar_lea.vmem [#allocation5], %s188
          %s190 = smul.u32 2, %s25
          %s192 = ssub.s32 128, 128
          %193 = vsyncadd %s186, %s192
          %s194 = smul.addr %s24, 2
          %s195 = sadd.s32 %s190, %s194
          %s196 = smul.addr %s195, 64
          %s197 = scalar_lea.hbm %s0, %s196
          %s199 = sshll.u32 %s189, 4
          %s200 = int_to_ptr.vmem [resolvable:$true] %s199
          %202 = dma.hbm_to_vmem [thread:$0]  %s197, 128, %s200, %s186
        $region20: #{tpu_custom_call.1} parent=15 // pred_fallthru
          _
        // Predicated region
        $region21: #{tpu_custom_call.1} parent=15 // pred_check
          %p203 = pneg %p79
        $region22: #{tpu_custom_call.1} parent=15 // pred_check_branch
          %205 = sbr.rel (%p203) target = $region24
        $region23: #{tpu_custom_call.1} parent=15 // pred_region
          %s206 = sand.u32 %s69, 1
          %s207 = scalar_lea.sflag [#allocation8], %s206
          %s208 = sand.u32 %s69, 1
          %s209 = smul.addr %s208, 2
          %s210 = scalar_lea.vmem [#allocation7], %s209
          %s211 = smul.u32 2, %s25
          %s213 = ssub.s32 32, 32
          %214 = vsyncadd %s207, %s213
          %s215 = smul.addr %s24, 2
          %s216 = sadd.s32 %s211, %s215
          %s217 = smul.addr %s216, 16
          %s218 = scalar_lea.hbm %s1, %s217
          %s220 = sshll.u32 %s210, 4
          %s221 = int_to_ptr.vmem [resolvable:$true] %s220
          %223 = dma.hbm_to_vmem [thread:$0]  %s218, 32, %s221, %s207
        $region24: #{tpu_custom_call.1} parent=15 // pred_fallthru
          _
      $region16: #{tpu_custom_call.1} parent=5 // pred_fallthru
        _
      %p224 = scmp.le.s32.totalorder 1, %s17
      %p225 = scmp.lt.s32.totalorder %s17, 3
      %p226 = pnand %p224, %p225
      %p227 = pneg %p226
      // Predicated region
      $region25: #{tpu_custom_call.1} parent=5 // pred_check
        _
      $region26: #{tpu_custom_call.1} parent=5 // pred_check_branch
        %229 = sbr.rel (%p226) target = $region28
      $region27: #{tpu_custom_call.1} parent=5 // pred_region
        %s230 = ssub.s32 %s17, 1
        %s231 = sand.u32 %s44, 1
        %s232 = scalar_lea.sflag [#allocation6], %s231
        %s233 = sand.u32 %s44, 1
        %s234 = smul.addr %s233, 8
        %s235 = scalar_lea.vmem [#allocation5], %s234
        // Predicated region
        $region29: #{tpu_custom_call.1} parent=27 // pred_check
          %p236 = pneg %p57
        $region30: #{tpu_custom_call.1} parent=27 // pred_check_branch
          %238 = sbr.rel (%p236) target = $region32
        $region31: #{tpu_custom_call.1} parent=27 // pred_region
          %239 = dma.done %s232, 128
        $region32: #{tpu_custom_call.1} parent=27 // pred_fallthru
          _
        %s240 = sand.u32 %s72, 1
        %s241 = scalar_lea.sflag [#allocation8], %s240
        %s242 = sand.u32 %s72, 1
        %s243 = smul.addr %s242, 2
        %s244 = scalar_lea.vmem [#allocation7], %s243
        // Predicated region
        $region33: #{tpu_custom_call.1} parent=27 // pred_check
          %p245 = pneg %p85
        $region34: #{tpu_custom_call.1} parent=27 // pred_check_branch
          %247 = sbr.rel (%p245) target = $region36
        $region35: #{tpu_custom_call.1} parent=27 // pred_region
          %248 = dma.done %s241, 32
        $region36: #{tpu_custom_call.1} parent=27 // pred_fallthru
          _
        %s249 = sand.u32 %s44, 1
        %s250 = scalar_lea.sflag [#allocation6], %s249
        %s251 = sand.u32 %s44, 1
        %s252 = smul.addr %s251, 8
        %s253 = scalar_lea.vmem [#allocation5], %s252
        %p254 = pneg %p57
        %p255 = pneg %p54
        %s256 = sand.u32 %s72, 1
        %s257 = scalar_lea.sflag [#allocation8], %s256
        %s258 = sand.u32 %s72, 1
        %s259 = smul.addr %s258, 2
        %s260 = scalar_lea.vmem [#allocation7], %s259
        %p261 = pneg %p85
        %p262 = pneg %p82
        %p263 = pneg %p111
        %p264 = pneg %p108
        %p265 = scmp.lt.s32.totalorder %s26, 1
        %s266 = scalar_select %p265, %s26, 1
        %s267 = smul.addr %s266, 4
        %s268 = scalar_lea.vmem %s2, %s267
        %p269 = pneg %p137
        %p270 = pneg %p134
        %p271 = scmp.lt.s32.totalorder %s26, 1
        %s272 = scalar_select %p271, %s26, 1
        %s273 = smul.addr %s272, 4
        %s274 = scalar_lea.vmem %s3, %s273
        %p275 = pneg %p163
        %p276 = pneg %p160
        %p277 = scmp.lt.s32.totalorder %s26, 1
        %s278 = scalar_select %p277, %s26, 1
        %s279 = smul.addr %s278, 4
        %s280 = scalar_lea.vmem %s4, %s279
        %s281 = smul.u32 2, %s27
        %s282 = smul.u32 2, %s27
        %p283 = scmp.lt.s32.totalorder %s26, 1
        %s284 = scalar_select %p283, %s26, 1
        %s285 = smul.addr %s284, 4
        %s286 = scalar_lea.vmem %s2, %s285
        %p287 = scmp.lt.s32.totalorder %s26, 1
        %s288 = scalar_select %p287, %s26, 1
        %s289 = smul.addr %s288, 4
        %s290 = scalar_lea.vmem %s3, %s289
        %p291 = scmp.lt.s32.totalorder %s26, 1
        %s292 = scalar_select %p291, %s26, 1
        %s293 = smul.addr %s292, 4
        %s294 = scalar_lea.vmem %s4, %s293
        %p295 = scmp.eq.s32.totalorder %s27, 0
        // Predicated region
        $region37: #{tpu_custom_call.1} parent=27 // pred_check
          %p296 = pneg %p295
        $region38: #{tpu_custom_call.1} parent=27 // pred_check_branch
          %298 = sbr.rel (%p296) target = $region40
        $region39: #{tpu_custom_call.1} parent=27 // pred_region
          %299 = vst [vmem:[#allocation2] sm:$0xff] 0.0
          %300 = vst [vmem:[#allocation3] sm:$0xff] 0.0
          %301 = vst [vmem:[#allocation4] sm:$0xff] 0.0
        $region40: #{tpu_custom_call.1} parent=27 // pred_fallthru
          _
        %v302 = vlaneseq
        %v303 = vshrl.u32 %v302, 7
        %v304 = vld [vmem:[%s235] sm:$0xff]
        %v305 = vld [vmem:[%s244] sm:$0x3]
        %v307 = vcombine.high %v304, %v304
        %vm309 = vcmask 1043456
        %v310 = vsel %vm309, %v304, -inf
        %v311 = vrot.slane %v310, 4
        %v312 = vmax.f32 %v310, %v311
        %v313 = vrot.slane %v312, 2
        %v314 = vmax.f32 %v312, %v313
        %v315 = vrot.slane %v314, 1
        %v316 = vmax.f32 %v314, %v315
        %v317 = vsel %vm309, %v307, -inf
        %v318 = vrot.slane %v317, 4
        %v319 = vmax.f32 %v317, %v318
        %v320 = vrot.slane %v319, 2
        %v321 = vmax.f32 %v319, %v320
        %v322 = vrot.slane %v321, 1
        %v323 = vmax.f32 %v321, %v322
        %v326 = vcombine.low %v316, %v323
        %v328 = vsub.f32 %v304, %v326
        %v329 = vmul.f32 %v328, 1.442695
        %v330 = vpow.pop %v329
        %v332 = vcombine.high %v330, %v330
        %v334 = vsel %vm309, %v330, 0.0
        %v335 = vrot.slane %v334, 4
        %v336 = vadd.f32 %v334, %v335
        %v337 = vrot.slane %v336, 2
        %v338 = vadd.f32 %v336, %v337
        %v339 = vrot.slane %v338, 1
        %v340 = vadd.f32 %v338, %v339
        %v341 = vsel %vm309, %v332, 0.0
        %v342 = vrot.slane %v341, 4
        %v343 = vadd.f32 %v341, %v342
        %v344 = vrot.slane %v343, 2
        %v345 = vadd.f32 %v343, %v344
        %v346 = vrot.slane %v345, 1
        %v347 = vadd.f32 %v345, %v346
        %v348 = vrcp.pop %v340
        %v349 = vrcp.pop %v347
        %v352 = vcombine.low %v348, %v349
        %v354 = vmul.f32 %v330, %v352
        %v355 = vlaneseq
        %v356 = vshrl.u32 %v355, 7
        %v357 = vsub.s32 0, %v356
        %v358 = vrot.slane %v305, %v357
        %v359 = vlaneseq
        %v360 = vshrl.u32 %v359, 7
        %v361 = vsub.s32 1, %v360
        %v362 = vrot.slane %v305, %v361
        %vm363 = vcmp.eq.s32.totalorder %v358, %v303
        %vm364 = vcmp.eq.s32.totalorder %v362, %v303
        %v365 = vsel %vm363, 1, 0
        %v366 = vsel %vm364, 1, 0
        %v367 = vcvt.s32.f32 %v365
        %v368 = vcvt.s32.f32 %v366
        %v371 = vcombine.low %v367, %v368
        %v373 = vmul.f32 %v354, %v371
        %v374 = vmul.f32 %v354, %v354
        %v375 = vadd.f32 %v373, 0.0
        %v376 = vadd.f32 %v367, 0.0
        %v377 = vadd.f32 %v368, 0.0
        %v378 = vadd.f32 %v374, 0.0
        %v379 = vld [vmem:[#allocation2] sm:$0xff]
        %v380 = vadd.f32 %v379, %v375
        %381 = vst [vmem:[#allocation2] sm:$0xff] %v380
        %v382 = vld [vmem:[#allocation3] sm:$0xff]
        %v385 = vcombine.low %v376, %v377
        %v387 = vadd.f32 %v382, %v385
        %388 = vst [vmem:[#allocation3] sm:$0xff] %v387
        %v389 = vld [vmem:[#allocation4] sm:$0xff]
        %v390 = vadd.f32 %v389, %v378
        %391 = vst [vmem:[#allocation4] sm:$0xff] %v390
        // Predicated region
        $region41: #{tpu_custom_call.1} parent=27 // pred_check
          %p392 = pneg %p295
        $region42: #{tpu_custom_call.1} parent=27 // pred_check_branch
          %394 = sbr.rel (%p392) target = $region44
        $region43: #{tpu_custom_call.1} parent=27 // pred_region
          %v395 = vld [vmem:[#allocation2] sm:$0xff]
          %v397 = vcombine.high %v395, %v395
          %v399 = vsel %vm309, %v395, 0.0
          %v400 = vsel %vm309, %v397, 0.0
          %v401 = vadd.f32 %v399, %v400
          %402 = vadd.xlane.f32.xlu0 %v401
          %v403 = vpop.xlane.xlu0 %402
          %vm404 = vcmask 3072
          %405 = vst.msk [vmem:[%s286] sm:$0xf] %vm404, %v403
          %v406 = vld [vmem:[#allocation3] sm:$0xff]
          %v408 = vcombine.high %v406, %v406
          %v410 = vsel %vm309, %v406, 0.0
          %v411 = vsel %vm309, %v408, 0.0
          %v412 = vadd.f32 %v410, %v411
          %413 = vadd.xlane.f32.xlu0 %v412
          %v414 = vpop.xlane.xlu0 %413
          %415 = vst.msk [vmem:[%s290] sm:$0xf] %vm404, %v414
          %v416 = vld [vmem:[#allocation4] sm:$0xff]
          %v418 = vcombine.high %v416, %v416
          %v420 = vsel %vm309, %v416, 0.0
          %v421 = vsel %vm309, %v418, 0.0
          %v422 = vadd.f32 %v420, %v421
          %423 = vadd.xlane.f32.xlu0 %v422
          %v424 = vpop.xlane.xlu0 %423
          %425 = vst.msk [vmem:[%s294] sm:$0xf] %vm404, %v424
        $region44: #{tpu_custom_call.1} parent=27 // pred_fallthru
          _
        %p426 = scmp.lt.s32.totalorder %s26, 1
        %s427 = scalar_select %p426, %s26, 1
        %s428 = smul.addr %s427, 4
        %s429 = scalar_lea.vmem %s2, %s428
        %p430 = scmp.lt.s32.totalorder %s26, 1
        %s431 = scalar_select %p430, %s26, 1
        %s432 = smul.addr %s431, 4
        %s433 = scalar_lea.vmem %s3, %s432
        %p434 = scmp.lt.s32.totalorder %s26, 1
        %s435 = scalar_select %p434, %s26, 1
        %s436 = smul.addr %s435, 4
        %s437 = scalar_lea.vmem %s4, %s436
        // Predicated region
        $region45: #{tpu_custom_call.1} parent=27 // pred_check
          %p438 = pneg %p108
        $region46: #{tpu_custom_call.1} parent=27 // pred_check_branch
          %440 = sbr.rel (%p438) target = $region48
        $region47: #{tpu_custom_call.1} parent=27 // pred_region
          _
        $region48: #{tpu_custom_call.1} parent=27 // pred_fallthru
          _
        // Predicated region
        $region49: #{tpu_custom_call.1} parent=27 // pred_check
          %p441 = pneg %p134
        $region50: #{tpu_custom_call.1} parent=27 // pred_check_branch
          %443 = sbr.rel (%p441) target = $region52
        $region51: #{tpu_custom_call.1} parent=27 // pred_region
          _
        $region52: #{tpu_custom_call.1} parent=27 // pred_fallthru
          _
        // Predicated region
        $region53: #{tpu_custom_call.1} parent=27 // pred_check
          %p444 = pneg %p160
        $region54: #{tpu_custom_call.1} parent=27 // pred_check_branch
          %446 = sbr.rel (%p444) target = $region56
        $region55: #{tpu_custom_call.1} parent=27 // pred_region
          _
        $region56: #{tpu_custom_call.1} parent=27 // pred_fallthru
          _
      $region28: #{tpu_custom_call.1} parent=5 // pred_fallthru
        _
      %p447 = scmp.le.s32.totalorder 2, %s17
      // Predicated region
      $region57: #{tpu_custom_call.1} parent=5 // pred_check
        %p448 = pneg %p447
      $region58: #{tpu_custom_call.1} parent=5 // pred_check_branch
        %450 = sbr.rel (%p448) target = $region60
      $region59: #{tpu_custom_call.1} parent=5 // pred_region
        %s451 = ssub.s32 %s17, 2
        // Predicated region
        $region61: #{tpu_custom_call.1} parent=59 // pred_check
          %p452 = pneg %p114
        $region62: #{tpu_custom_call.1} parent=59 // pred_check_branch
          %454 = sbr.rel (%p452) target = $region64
        $region63: #{tpu_custom_call.1} parent=59 // pred_region
          %p455 = scmp.lt.s32.totalorder %s28, 1
          %s456 = scalar_select %p455, %s28, 1
          %s457 = smul.addr %s456, 4
          %s458 = scalar_lea.vmem %s2, %s457
        $region64: #{tpu_custom_call.1} parent=59 // pred_fallthru
          _
        // Predicated region
        $region65: #{tpu_custom_call.1} parent=59 // pred_check
          %p459 = pneg %p140
        $region66: #{tpu_custom_call.1} parent=59 // pred_check_branch
          %461 = sbr.rel (%p459) target = $region68
        $region67: #{tpu_custom_call.1} parent=59 // pred_region
          %p462 = scmp.lt.s32.totalorder %s28, 1
          %s463 = scalar_select %p462, %s28, 1
          %s464 = smul.addr %s463, 4
          %s465 = scalar_lea.vmem %s3, %s464
        $region68: #{tpu_custom_call.1} parent=59 // pred_fallthru
          _
        // Predicated region
        $region69: #{tpu_custom_call.1} parent=59 // pred_check
          %p466 = pneg %p166
        $region70: #{tpu_custom_call.1} parent=59 // pred_check_branch
          %468 = sbr.rel (%p466) target = $region72
        $region71: #{tpu_custom_call.1} parent=59 // pred_region
          %p469 = scmp.lt.s32.totalorder %s28, 1
          %s470 = scalar_select %p469, %s28, 1
          %s471 = smul.addr %s470, 4
          %s472 = scalar_lea.vmem %s4, %s471
        $region72: #{tpu_custom_call.1} parent=59 // pred_fallthru
          _
      $region60: #{tpu_custom_call.1} parent=5 // pred_fallthru
        _
    $region6: #{tpu_custom_call.1} parent=1 // loop_footer
      %s21 = sadd.s32 1, %s17
    $region7: #{tpu_custom_call.1} parent=1 // loop_footer_branch
      %16 = sbr.rel target = $region3
    $region8: #{tpu_custom_call.1} parent=1 // loop_exit
      _
    %473 = vsyncpa [#allocation6], 1
    %s474 = scalar_lea.sflag [#allocation6], 1
    %475 = vsyncpa %s474, 1
    %476 = vsyncpa [#allocation8], 1
    %s477 = scalar_lea.sflag [#allocation8], 1
    %478 = vsyncpa %s477, 1

</llo_original>
